<compile_context>
chip_gen: v7x
topology: tpu7x:2x2x1
jax: 0.10.0
libtpu: 0.0.40
codegen_flags: <defaults>
</compile_context>

<pallas_src>
import jax
import jax.numpy as jnp
from jax.experimental import pallas as pl
from jax.experimental.pallas import tpu as pltpu


def _round_up(n: int, m: int) -> int:
    return ((n + m - 1) // m) * m


def _ae_forward_kernel(x_ref, w_enc_ref, b_enc_ref, w_dec_ref, b_dec_ref, o_ref):
    # encoder: Linear + ReLU  (MXU matmul, f32 accumulation; operands may be bf16)
    h = jnp.dot(x_ref[...], w_enc_ref[...], preferred_element_type=jnp.float32)
    h = jnp.maximum(h + b_enc_ref[...], 0.0)          # (TB, Hp) + (1, Hp), f32

    # decoder: Linear + Sigmoid (cast h back to weight dtype for the MXU)
    y = jnp.dot(h.astype(w_dec_ref.dtype), w_dec_ref[...],
                preferred_element_type=jnp.float32)
    y = jax.nn.sigmoid(y + b_dec_ref[...])            # f32 epilogue (EUP)
    o_ref[...] = y.astype(o_ref.dtype)


def autoencoder_forward(x_nchw, params, *, use_bf16=True):
    """x_nchw: (B, C, H, W) float32.  Returns decoded (B, C, H, W) float32."""
    B, C, H, W = x_nchw.shape
    D = C * H * W
    w_enc, b_enc, w_dec, b_dec = params
    Hd = w_enc.shape[1]

    # --- MXU / lane-friendly padded shapes -------------------------------
    D_pad = _round_up(D, 128)                 # lane-dense last dims
    Hd_pad = _round_up(Hd, 128)               # lane-dense hidden dim
    TB = min(256, _round_up(B, 8))            # batch tile (sublane multiple)
    B_pad = _round_up(B, TB)

    compute_dtype = jnp.bfloat16 if use_bf16 else jnp.float32

    # --- zero-pad operands (zeros are exact no-ops through the math) ------
    x_flat = x_nchw.reshape(B, D)
    x_p = jnp.zeros((B_pad, D_pad), compute_dtype).at[:B, :D].set(
        x_flat.astype(compute_dtype))
    w_enc_p = jnp.zeros((D_pad, Hd_pad), compute_dtype).at[:D, :Hd].set(
        w_enc.astype(compute_dtype))
    b_enc_p = jnp.zeros((1, Hd_pad), jnp.float32).at[:, :Hd].set(
        b_enc.astype(jnp.float32))
    w_dec_p = jnp.zeros((Hd_pad, D_pad), compute_dtype).at[:Hd, :D].set(
        w_dec.astype(compute_dtype))
    b_dec_p = jnp.zeros((1, D_pad), jnp.float32).at[:, :D].set(
        b_dec.astype(jnp.float32))

    grid = (B_pad // TB,)

    itemsize = jnp.dtype(compute_dtype).itemsize
    cost = pl.CostEstimate(
        flops=2 * B_pad * D_pad * Hd_pad * 2,          # two matmuls
        transcendentals=B_pad * D_pad,                 # sigmoid
        bytes_accessed=(B_pad * D_pad * itemsize       # x
                        + D_pad * Hd_pad * itemsize    # w_enc
                        + Hd_pad * 4                   # b_enc
                        + Hd_pad * D_pad * itemsize    # w_dec
                        + D_pad * 4                    # b_dec
                        + B_pad * D_pad * 4))          # out (f32)

    out_padded = pl.pallas_call(
        _ae_forward_kernel,
        out_shape=jax.ShapeDtypeStruct((B_pad, D_pad), jnp.float32),
        grid=grid,
        in_specs=[
            pl.BlockSpec((TB, D_pad), lambda i: (i, 0)),       # x: batch-tiled
            pl.BlockSpec((D_pad, Hd_pad), lambda i: (0, 0)),   # w_enc: resident
            pl.BlockSpec((1, Hd_pad), lambda i: (0, 0)),       # b_enc: resident
            pl.BlockSpec((Hd_pad, D_pad), lambda i: (0, 0)),   # w_dec: resident
            pl.BlockSpec((1, D_pad), lambda i: (0, 0)),        # b_dec: resident
        ],
        out_specs=pl.BlockSpec((TB, D_pad), lambda i: (i, 0)),
        compiler_params=pltpu.CompilerParams(
            dimension_semantics=("parallel",),
            vmem_limit_bytes=64 * 1024 * 1024),
        cost_estimate=cost,
    )(x_p, w_enc_p, b_enc_p, w_dec_p, b_dec_p)

    return out_padded[:B, :D].reshape(B, C, H, W)


def init_params(key, in_dim, hidden_dim):
    """Deterministic, PyTorch-Linear-style init (uniform(-1/sqrt(fan_in), ...))."""
    k1, k2, k3, k4 = jax.random.split(key, 4)
    bound_e = 1.0 / jnp.sqrt(in_dim)
    bound_d = 1.0 / jnp.sqrt(hidden_dim)
    w_enc = jax.random.uniform(k1, (in_dim, hidden_dim), jnp.float32,
                               -bound_e, bound_e)
    b_enc = jax.random.uniform(k2, (1, hidden_dim), jnp.float32,
                               -bound_e, bound_e)
    w_dec = jax.random.uniform(k3, (hidden_dim, in_dim), jnp.float32,
                               -bound_d, bound_d)
    b_dec = jax.random.uniform(k4, (1, in_dim), jnp.float32,
                               -bound_d, bound_d)
    return w_enc, b_enc, w_dec, b_dec


def _reference_forward(x_nchw, params):
    """Pure-JAX f32 reference for correctness check."""
    B = x_nchw.shape[0]
    w_enc, b_enc, w_dec, b_dec = params
    x = x_nchw.reshape(B, -1)
    h = jnp.maximum(x @ w_enc + b_enc, 0.0)
    y = jax.nn.sigmoid(h @ w_dec + b_dec)
    return y.reshape(x_nchw.shape)


if __name__ == "__main__":
    key = jax.random.PRNGKey(0)
    k_x, k_p = jax.random.split(key)

    # Small shapes consistent with the module: batch=2, channels=1, spatial=16.
    B, C, S = 2, 1, 16
    HIDDEN = 32
    D = C * S * S

    x = jax.random.normal(k_x, (B, C, S, S), jnp.float32)
    params = init_params(k_p, D, HIDDEN)

    # bf16 matmul path (default, MXU fast path on v6e/v7x)
    out_bf16 = jax.block_until_ready(autoencoder_forward(x, params, use_bf16=True))
    # f32 path (bit-accurate vs reference)
    out_f32 = jax.block_until_ready(autoencoder_forward(x, params, use_bf16=False))

    ref = _reference_forward(x, params)
    assert out_bf16.shape == x.shape and out_f32.shape == x.shape
    assert jnp.allclose(out_f32, ref, atol=1e-5, rtol=1e-5), "f32 mismatch vs reference"
    assert jnp.allclose(out_bf16, ref, atol=2e-2, rtol=2e-2), "bf16 mismatch vs reference"

    print("KERNEL_OK")
</pallas_src>

<mosaic_0001>
module attributes {stable_mosaic.version = 11 : i64} {
  func.func @_ae_forward_kernel(%arg0: i32, %arg1: memref<8x256xbf16, #tpu.memory_space<vmem>>, %arg2: memref<256x128xbf16, #tpu.memory_space<vmem>>, %arg3: memref<1x128xf32, #tpu.memory_space<vmem>>, %arg4: memref<128x256xbf16, #tpu.memory_space<vmem>>, %arg5: memref<1x256xf32, #tpu.memory_space<vmem>>, %arg6: memref<8x256xf32, #tpu.memory_space<vmem>>) attributes {dimension_semantics = [#tpu.dimension_semantics<parallel>], iteration_bounds = array<i64: 1>, scalar_prefetch = 0 : i64, scratch_operands = 0 : i64, tpu.core_type = #tpu.core_type<tc>, window_params = [{transform_indices = @transform_0, window_bounds = array<i64: 8, 256>}, {pipeline_mode = #tpu.pipeline_mode<synchronous>, transform_indices = @transform_1, window_bounds = array<i64: 256, 128>}, {pipeline_mode = #tpu.pipeline_mode<synchronous>, transform_indices = @transform_2, window_bounds = array<i64: 1, 128>}, {pipeline_mode = #tpu.pipeline_mode<synchronous>, transform_indices = @transform_3, window_bounds = array<i64: 128, 256>}, {pipeline_mode = #tpu.pipeline_mode<synchronous>, transform_indices = @transform_4, window_bounds = array<i64: 1, 256>}, {transform_indices = @transform_5, window_bounds = array<i64: 8, 256>}]} {
    %c0 = arith.constant 0 : index
    %c0_0 = arith.constant 0 : index
    %0 = vector.load %arg1[%c0, %c0_0] : memref<8x256xbf16, #tpu.memory_space<vmem>>, vector<8x256xbf16>
    %c0_1 = arith.constant 0 : index
    %c0_2 = arith.constant 0 : index
    %1 = vector.load %arg2[%c0_1, %c0_2] : memref<256x128xbf16, #tpu.memory_space<vmem>>, vector<256x128xbf16>
    %cst = arith.constant dense<0.000000e+00> : vector<8x128xf32>
    %2 = tpu.matmul %0, %1, %cst {dimension_numbers = #tpu.dot_dimension_numbers<[1], [0], [0], [1], [0, 0, 1, 1], [], []>} : vector<8x256xbf16>, vector<256x128xbf16>, vector<8x128xf32> -> vector<8x128xf32>
    %c0_3 = arith.constant 0 : index
    %c0_4 = arith.constant 0 : index
    %3 = vector.load %arg3[%c0_3, %c0_4] : memref<1x128xf32, #tpu.memory_space<vmem>>, vector<1x128xf32>
    %4 = vector.broadcast %3 : vector<1x128xf32> to vector<8x128xf32>
    %5 = arith.addf %2, %4 : vector<8x128xf32>
    %cst_5 = arith.constant 0.000000e+00 : f32
    %6 = vector.broadcast %cst_5 : f32 to vector<8x128xf32>
    %7 = arith.maximumf %5, %6 : vector<8x128xf32>
    %8 = arith.truncf %7 : vector<8x128xf32> to vector<8x128xbf16>
    %c0_6 = arith.constant 0 : index
    %c0_7 = arith.constant 0 : index
    %9 = vector.load %arg4[%c0_6, %c0_7] : memref<128x256xbf16, #tpu.memory_space<vmem>>, vector<128x256xbf16>
    %cst_8 = arith.constant dense<0.000000e+00> : vector<8x256xf32>
    %10 = tpu.matmul %8, %9, %cst_8 {dimension_numbers = #tpu.dot_dimension_numbers<[1], [0], [0], [1], [0, 0, 1, 1], [], []>} : vector<8x128xbf16>, vector<128x256xbf16>, vector<8x256xf32> -> vector<8x256xf32>
    %c0_9 = arith.constant 0 : index
    %c0_10 = arith.constant 0 : index
    %11 = vector.load %arg5[%c0_9, %c0_10] : memref<1x256xf32, #tpu.memory_space<vmem>>, vector<1x256xf32>
    %12 = vector.broadcast %11 : vector<1x256xf32> to vector<8x256xf32>
    %13 = arith.addf %10, %12 : vector<8x256xf32>
    %14 = arith.negf %13 : vector<8x256xf32>
    %15 = math.exp %14 : vector<8x256xf32>
    %cst_11 = arith.constant 1.000000e+00 : f32
    %16 = vector.broadcast %cst_11 : f32 to vector<8x256xf32>
    %17 = arith.addf %16, %15 : vector<8x256xf32>
    %18 = arith.divf %16, %17 : vector<8x256xf32>
    %c0_12 = arith.constant 0 : index
    %c0_13 = arith.constant 0 : index
    %19 = vector.load %arg6[%c0_12, %c0_13] : memref<8x256xf32, #tpu.memory_space<vmem>>, vector<8x256xf32>
    tpu.vector_store %arg6[%c0_12, %c0_13], %18 {strides = array<i32>} : memref<8x256xf32, #tpu.memory_space<vmem>>, vector<8x256xf32>,
    return
  }
  func.func @transform_0(%arg0: i32) -> (i32, i32) {
    %c0_i32 = arith.constant 0 : i32
    %c0_i32_0 = arith.constant 0 : i32
    return %arg0, %c0_i32 : i32, i32
  }
  func.func @transform_1(%arg0: i32) -> (i32, i32) {
    %c0_i32 = arith.constant 0 : i32
    %c0_i32_0 = arith.constant 0 : i32
    %c0_i32_1 = arith.constant 0 : i32
    return %c0_i32, %c0_i32_0 : i32, i32
  }
  func.func @transform_2(%arg0: i32) -> (i32, i32) {
    %c0_i32 = arith.constant 0 : i32
    %c0_i32_0 = arith.constant 0 : i32
    %c0_i32_1 = arith.constant 0 : i32
    return %c0_i32, %c0_i32_0 : i32, i32
  }
  func.func @transform_3(%arg0: i32) -> (i32, i32) {
    %c0_i32 = arith.constant 0 : i32
    %c0_i32_0 = arith.constant 0 : i32
    %c0_i32_1 = arith.constant 0 : i32
    return %c0_i32, %c0_i32_0 : i32, i32
  }
  func.func @transform_4(%arg0: i32) -> (i32, i32) {
    %c0_i32 = arith.constant 0 : i32
    %c0_i32_0 = arith.constant 0 : i32
    %c0_i32_1 = arith.constant 0 : i32
    return %c0_i32, %c0_i32_0 : i32, i32
  }
  func.func @transform_5(%arg0: i32) -> (i32, i32) {
    %c0_i32 = arith.constant 0 : i32
    %c0_i32_0 = arith.constant 0 : i32
    return %arg0, %c0_i32 : i32, i32
  }
}

</mosaic_0001>

<llo_original>
// kernel: tpu_custom_call.1
$region0: #{tpu_custom_call.1}
  #allocation0 [shape = 'u32[]', space=smem, size = 0x4, offset = 0x4, fixed_abs, tag = 'smem constant byte address 0x4 - core index']
  #allocation1 [shape = 'u32[144,128]{1,0:T(1,128)}', space=vmem, size = 0x12000, scoped, tag = 'internal scratch']
  %s0 = inlined_call_operand.hbm [shape: bf16[8,256], index: 0, kind: input, shape index: {}]
  %s1 = inlined_call_operand.hbm [shape: bf16[256,128], index: 1, kind: input, shape index: {}]
  %s2 = inlined_call_operand.hbm [shape: f32[1,128], index: 2, kind: input, shape index: {}]
  %s3 = inlined_call_operand.hbm [shape: bf16[128,256], index: 3, kind: input, shape index: {}]
  %s4 = inlined_call_operand.hbm [shape: f32[1,256], index: 4, kind: input, shape index: {}]
  %s5 = inlined_call_operand.hbm [shape: f32[8,256], index: 5, kind: output, shape index: {}]
  %s6 = sld [smem:[#allocation0]]
  $region50: #{tpu_custom_call.1} parent=0
    _
  %s8 = ssub.s32 1, %s6
  %s9 = scalar_select 0, %s8, %s6
  $region1: #{tpu_custom_call.1} parent=0
    #allocation2 [shape = 'u8[4096]{0}', space=vmem, size = 0x1000, scoped, tag = 'input window, operand 0, single buffered']
    #allocation3 [shape = 's32[1]{0}', space=sflag, size = 0x4, scoped, tag = 'scoped memory for tpu_custom_call.1']
    #allocation4 [shape = 's32[1]{0}', space=sflag, size = 0x4, scoped, tag = 'scoped memory for tpu_custom_call.1']
    #allocation5 [shape = 'u8[65536]{0}', space=vmem, size = 0x10000, scoped, tag = 'input window, operand 1, single buffered']
    #allocation6 [shape = 's32[1]{0}', space=sflag, size = 0x4, scoped, tag = 'scoped memory for tpu_custom_call.1']
    #allocation7 [shape = 'u8[512]{0}', space=vmem, size = 0x400, scoped, tag = 'input window, operand 2, single buffered']
    #allocation8 [shape = 'u8[65536]{0}', space=vmem, size = 0x10000, scoped, tag = 'input window, operand 3, single buffered']
    #allocation9 [shape = 's32[1]{0}', space=sflag, size = 0x4, scoped, tag = 'scoped memory for tpu_custom_call.1']
    #allocation10 [shape = 'u8[1024]{0}', space=vmem, size = 0x400, scoped, tag = 'input window, operand 4, single buffered']
    #allocation11 [shape = 'u8[8192]{0}', space=vmem, size = 0x2000, scoped, tag = 'output window, operand 0, single buffered']
    %10 = vsyncpa [#allocation3], 0
    %11 = vsyncpa [#allocation6], 0
    %12 = vsyncpa [#allocation9], 0
    %13 = vsyncpa [#allocation4], 0
    // Predicated region
    $region2: #{tpu_custom_call.1} parent=1 // pred_check
      _
    $region3: #{tpu_custom_call.1} parent=1 // pred_check_branch
      %15 = sbr.rel (0) target = $region5
    $region4: #{tpu_custom_call.1} parent=1 // pred_region
      %s17 = ssub.s32 128, 128
      %18 = vsyncadd [#allocation3], %s17
      %s20 = sshll.u32 [#allocation2], 4
      %s21 = int_to_ptr.vmem [resolvable:$true] %s20
      %23 = dma.hbm_to_vmem [thread:$0]  %s0, 128, %s21, [#allocation3]
    $region5: #{tpu_custom_call.1} parent=1 // pred_fallthru
      _
    // Predicated region
    $region6: #{tpu_custom_call.1} parent=1 // pred_check
      _
    $region7: #{tpu_custom_call.1} parent=1 // pred_check_branch
      %25 = sbr.rel (0) target = $region9
    $region8: #{tpu_custom_call.1} parent=1 // pred_region
      %s27 = ssub.s32 2048, 2048
      %28 = vsyncadd [#allocation6], %s27
      %s29 = sshll.u32 [#allocation5], 4
      %s30 = int_to_ptr.vmem [resolvable:$true] %s29
      %35 = dma.hbm_to_vmem [thread:$0]  %s1, 2048, %s30, [#allocation6], 64, 64, 4
    $region9: #{tpu_custom_call.1} parent=1 // pred_fallthru
      _
    // Predicated region
    $region10: #{tpu_custom_call.1} parent=1 // pred_check
      _
    $region11: #{tpu_custom_call.1} parent=1 // pred_check_branch
      %37 = sbr.rel (0) target = $region13
    $region12: #{tpu_custom_call.1} parent=1 // pred_region
      %s39 = ssub.s32 16, 16
      %40 = vsyncadd [#allocation6], %s39
      %s42 = sshll.u32 [#allocation7], 4
      %s43 = int_to_ptr.vmem [resolvable:$true] %s42
      %45 = dma.hbm_to_vmem [thread:$0]  %s2, 16, %s43, [#allocation6]
    $region13: #{tpu_custom_call.1} parent=1 // pred_fallthru
      _
    // Predicated region
    $region14: #{tpu_custom_call.1} parent=1 // pred_check
      _
    $region15: #{tpu_custom_call.1} parent=1 // pred_check_branch
      %47 = sbr.rel (0) target = $region17
    $region16: #{tpu_custom_call.1} parent=1 // pred_region
      %s49 = ssub.s32 2048, 2048
      %50 = vsyncadd [#allocation9], %s49
      %s51 = sshll.u32 [#allocation8], 4
      %s52 = int_to_ptr.vmem [resolvable:$true] %s51
      %57 = dma.hbm_to_vmem [thread:$0]  %s3, 2048, %s52, [#allocation9], 128, 128, 8
    $region17: #{tpu_custom_call.1} parent=1 // pred_fallthru
      _
    // Predicated region
    $region18: #{tpu_custom_call.1} parent=1 // pred_check
      _
    $region19: #{tpu_custom_call.1} parent=1 // pred_check_branch
      %59 = sbr.rel (0) target = $region21
    $region20: #{tpu_custom_call.1} parent=1 // pred_region
      %s61 = ssub.s32 32, 32
      %62 = vsyncadd [#allocation9], %s61
      %s64 = sshll.u32 [#allocation10], 4
      %s65 = int_to_ptr.vmem [resolvable:$true] %s64
      %67 = dma.hbm_to_vmem [thread:$0]  %s4, 32, %s65, [#allocation9]
    $region21: #{tpu_custom_call.1} parent=1 // pred_fallthru
      _
    // Predicated region
    $region22: #{tpu_custom_call.1} parent=1 // pred_check
      _
    $region23: #{tpu_custom_call.1} parent=1 // pred_check_branch
      %69 = sbr.rel (0) target = $region25
    $region24: #{tpu_custom_call.1} parent=1 // pred_region
      %70 = dma.done [#allocation3], 128
    $region25: #{tpu_custom_call.1} parent=1 // pred_fallthru
      _
    // Predicated region
    $region26: #{tpu_custom_call.1} parent=1 // pred_check
      _
    $region27: #{tpu_custom_call.1} parent=1 // pred_check_branch
      %72 = sbr.rel (0) target = $region29
    $region28: #{tpu_custom_call.1} parent=1 // pred_region
      %73 = dma.done [#allocation6], 2048
    $region29: #{tpu_custom_call.1} parent=1 // pred_fallthru
      _
    // Predicated region
    $region30: #{tpu_custom_call.1} parent=1 // pred_check
      _
    $region31: #{tpu_custom_call.1} parent=1 // pred_check_branch
      %75 = sbr.rel (0) target = $region33
    $region32: #{tpu_custom_call.1} parent=1 // pred_region
      %76 = dma.done [#allocation6], 16
    $region33: #{tpu_custom_call.1} parent=1 // pred_fallthru
      _
    // Predicated region
    $region34: #{tpu_custom_call.1} parent=1 // pred_check
      _
    $region35: #{tpu_custom_call.1} parent=1 // pred_check_branch
      %78 = sbr.rel (0) target = $region37
    $region36: #{tpu_custom_call.1} parent=1 // pred_region
      %79 = dma.done [#allocation9], 2048
    $region37: #{tpu_custom_call.1} parent=1 // pred_fallthru
      _
    // Predicated region
    $region38: #{tpu_custom_call.1} parent=1 // pred_check
      _
    $region39: #{tpu_custom_call.1} parent=1 // pred_check_branch
      %81 = sbr.rel (0) target = $region41
    $region40: #{tpu_custom_call.1} parent=1 // pred_region
      %82 = dma.done [#allocation9], 32
    $region41: #{tpu_custom_call.1} parent=1 // pred_fallthru
      _
    %v84 = vld [vmem:[#allocation2] sm:$0xff]
    %v85 = vld [vmem:[#allocation5] sm:$0xf]
    %v86 = vld [vmem:[#allocation5 + $0x4] sm:$0xf]
    %v87 = vld [vmem:[#allocation5 + $0x8] sm:$0xf]
    %v88 = vld [vmem:[#allocation5 + $0xc] sm:$0xf]
    %v89 = vld [vmem:[#allocation5 + $0x10] sm:$0xf]
    %v90 = vld [vmem:[#allocation5 + $0x14] sm:$0xf]
    %v91 = vld [vmem:[#allocation5 + $0x18] sm:$0xf]
    %v92 = vld [vmem:[#allocation5 + $0x1c] sm:$0xf]
    %v93 = vld [vmem:[#allocation5 + $0x20] sm:$0xf]
    %v94 = vld [vmem:[#allocation5 + $0x24] sm:$0xf]
    %v95 = vld [vmem:[#allocation5 + $0x28] sm:$0xf]
    %v96 = vld [vmem:[#allocation5 + $0x2c] sm:$0xf]
    %v97 = vld [vmem:[#allocation5 + $0x30] sm:$0xf]
    %v98 = vld [vmem:[#allocation5 + $0x34] sm:$0xf]
    %v99 = vld [vmem:[#allocation5 + $0x38] sm:$0xf]
    %v100 = vld [vmem:[#allocation5 + $0x3c] sm:$0xf]
    %v101 = vld [vmem:[#allocation5 + $0x40] sm:$0xf]
    %v102 = vld [vmem:[#allocation5 + $0x44] sm:$0xf]
    %v103 = vld [vmem:[#allocation5 + $0x48] sm:$0xf]
    %v104 = vld [vmem:[#allocation5 + $0x4c] sm:$0xf]
    %v105 = vld [vmem:[#allocation5 + $0x50] sm:$0xf]
    %v106 = vld [vmem:[#allocation5 + $0x54] sm:$0xf]
    %v107 = vld [vmem:[#allocation5 + $0x58] sm:$0xf]
    %v108 = vld [vmem:[#allocation5 + $0x5c] sm:$0xf]
    %v109 = vld [vmem:[#allocation5 + $0x60] sm:$0xf]
    %v110 = vld [vmem:[#allocation5 + $0x64] sm:$0xf]
    %v111 = vld [vmem:[#allocation5 + $0x68] sm:$0xf]
    %v112 = vld [vmem:[#allocation5 + $0x6c] sm:$0xf]
    %v113 = vld [vmem:[#allocation5 + $0x70] sm:$0xf]
    %v114 = vld [vmem:[#allocation5 + $0x74] sm:$0xf]
    %v115 = vld [vmem:[#allocation5 + $0x78] sm:$0xf]
    %v116 = vld [vmem:[#allocation5 + $0x7c] sm:$0xf]
    %v117 = vld [vmem:[#allocation7] sm:$0x1]
    %v119 = vlaneseq
    %v120 = vshrl.u32 %v119, 7
    %v121 = vsub.s32 0, %v120
    %v122 = vrot.slane %v117, %v121
    %v125 = vunpack.c.l.b16 %v84
    %v126 = vunpack.c.h.b16 %v84
    %v127 = vpack.c.b16 %v125, %v125
    %v128 = vpack.c.b16 %v126, %v126
    %v163 = vunpack.c.l.b16 %v85
    %v164 = vunpack.c.l.b16 %v86
    %v165 = vunpack.c.l.b16 %v87
    %v166 = vunpack.c.l.b16 %v88
    %v167 = vunpack.c.l.b16 %v89
    %v168 = vunpack.c.l.b16 %v90
    %v169 = vunpack.c.l.b16 %v91
    %v170 = vunpack.c.l.b16 %v92
    %v171 = vunpack.c.l.b16 %v93
    %v172 = vunpack.c.l.b16 %v94
    %v173 = vunpack.c.l.b16 %v95
    %v174 = vunpack.c.l.b16 %v96
    %v175 = vunpack.c.l.b16 %v97
    %v176 = vunpack.c.l.b16 %v98
    %v177 = vunpack.c.l.b16 %v99
    %v178 = vunpack.c.l.b16 %v100
    %v179 = vunpack.c.l.b16 %v101
    %v180 = vunpack.c.l.b16 %v102
    %v181 = vunpack.c.l.b16 %v103
    %v182 = vunpack.c.l.b16 %v104
    %v183 = vunpack.c.l.b16 %v105
    %v184 = vunpack.c.l.b16 %v106
    %v185 = vunpack.c.l.b16 %v107
    %v186 = vunpack.c.l.b16 %v108
    %v187 = vunpack.c.l.b16 %v109
    %v188 = vunpack.c.l.b16 %v110
    %v189 = vunpack.c.l.b16 %v111
    %v190 = vunpack.c.l.b16 %v112
    %v191 = vunpack.c.l.b16 %v113
    %v192 = vunpack.c.l.b16 %v114
    %v193 = vunpack.c.l.b16 %v115
    %v194 = vunpack.c.l.b16 %v116
    %v195 = vpack.c.b16 %v164, %v163
    %v196 = vpack.c.b16 %v166, %v165
    %v197 = vpack.c.b16 %v168, %v167
    %v198 = vpack.c.b16 %v170, %v169
    %v199 = vpack.c.b16 %v172, %v171
    %v200 = vpack.c.b16 %v174, %v173
    %v201 = vpack.c.b16 %v176, %v175
    %v202 = vpack.c.b16 %v178, %v177
    %v203 = vpack.c.b16 %v180, %v179
    %v204 = vpack.c.b16 %v182, %v181
    %v205 = vpack.c.b16 %v184, %v183
    %v206 = vpack.c.b16 %v186, %v185
    %v207 = vpack.c.b16 %v188, %v187
    %v208 = vpack.c.b16 %v190, %v189
    %v209 = vpack.c.b16 %v192, %v191
    %v210 = vpack.c.b16 %v194, %v193
    %227 = vmatprep.subr.bf16.mxu0 0
    %228 = vmatpush1.bf16.msra.mxu0 %v195
    %229 = vmatprep.subr.bf16.mxu0 0
    %230 = vmatpush1.bf16.msra.mxu0 %v196
    %231 = vmatprep.subr.bf16.mxu0 0
    %232 = vmatpush1.bf16.msra.mxu0 %v197
    %233 = vmatprep.subr.bf16.mxu0 0
    %234 = vmatpush1.bf16.msra.mxu0 %v198
    %235 = vmatprep.subr.bf16.mxu0 0
    %236 = vmatpush1.bf16.msra.mxu0 %v199
    %237 = vmatprep.subr.bf16.mxu0 0
    %238 = vmatpush1.bf16.msra.mxu0 %v200
    %239 = vmatprep.subr.bf16.mxu0 0
    %240 = vmatpush1.bf16.msra.mxu0 %v201
    %241 = vmatprep.subr.bf16.mxu0 0
    %242 = vmatpush1.bf16.msra.mxu0 %v202
    %243 = vmatprep.subr.bf16.mxu0 0
    %244 = vmatpush1.bf16.msra.mxu0 %v203
    %245 = vmatprep.subr.bf16.mxu0 0
    %246 = vmatpush1.bf16.msra.mxu0 %v204
    %247 = vmatprep.subr.bf16.mxu0 0
    %248 = vmatpush1.bf16.msra.mxu0 %v205
    %249 = vmatprep.subr.bf16.mxu0 0
    %250 = vmatpush1.bf16.msra.mxu0 %v206
    %251 = vmatprep.subr.bf16.mxu0 0
    %252 = vmatpush1.bf16.msra.mxu0 %v207
    %253 = vmatprep.subr.bf16.mxu0 0
    %254 = vmatpush1.bf16.msra.mxu0 %v208
    %255 = vmatprep.subr.bf16.mxu0 0
    %256 = vmatpush1.bf16.msra.mxu0 %v209
    %257 = vmatprep.subr.bf16.mxu0 0
    %258 = vmatpush1.bf16.msra.mxu0 %v210
    %259 = vmatprep.mubr.bf16.mxu0 %v128
    %260 = vmatmul.mubr.bf16.gmra.mrb[0].mxu0 %v127
    %v261 = vpop.f32.mrb[0].mxu0
    %v262 = vadd.f32 %v122, %v261
    %v263 = vpop.f32.mrb[0].mxu0
    %v264 = vpop.f32.mrb[0].mxu0
    %v265 = vpop.f32.mrb[0].mxu0
    %266 = vdwg.mxu0
    %v267 = vmax.f32 %v262, 0.0
    %v268 = vpack.c.bf16 %v267, %v267
    %v269 = vld [vmem:[#allocation8] sm:$0xff]
    %v270 = vld [vmem:[#allocation8 + $0x8] sm:$0xff]
    %v271 = vld [vmem:[#allocation8 + $0x10] sm:$0xff]
    %v272 = vld [vmem:[#allocation8 + $0x18] sm:$0xff]
    %v273 = vld [vmem:[#allocation8 + $0x20] sm:$0xff]
    %v274 = vld [vmem:[#allocation8 + $0x28] sm:$0xff]
    %v275 = vld [vmem:[#allocation8 + $0x30] sm:$0xff]
    %v276 = vld [vmem:[#allocation8 + $0x38] sm:$0xff]
    %v277 = vld [vmem:[#allocation8 + $0x40] sm:$0xff]
    %v278 = vld [vmem:[#allocation8 + $0x48] sm:$0xff]
    %v279 = vld [vmem:[#allocation8 + $0x50] sm:$0xff]
    %v280 = vld [vmem:[#allocation8 + $0x58] sm:$0xff]
    %v281 = vld [vmem:[#allocation8 + $0x60] sm:$0xff]
    %v282 = vld [vmem:[#allocation8 + $0x68] sm:$0xff]
    %v283 = vld [vmem:[#allocation8 + $0x70] sm:$0xff]
    %v284 = vld [vmem:[#allocation8 + $0x78] sm:$0xff]
    %v285 = vld [vmem:[#allocation10] sm:$0x3]
    %v287 = vlaneseq
    %v288 = vshrl.u32 %v287, 7
    %v289 = vsub.s32 0, %v288
    %v290 = vrot.slane %v285, %v289
    %v291 = vlaneseq
    %v292 = vshrl.u32 %v291, 7
    %v293 = vsub.s32 1, %v292
    %v294 = vrot.slane %v285, %v293
    %v313 = vunpack.c.l.b16 %v269
    %v314 = vunpack.c.h.b16 %v269
    %v315 = vunpack.c.l.b16 %v270
    %v316 = vunpack.c.h.b16 %v270
    %v317 = vunpack.c.l.b16 %v271
    %v318 = vunpack.c.h.b16 %v271
    %v319 = vunpack.c.l.b16 %v272
    %v320 = vunpack.c.h.b16 %v272
    %v321 = vunpack.c.l.b16 %v273
    %v322 = vunpack.c.h.b16 %v273
    %v323 = vunpack.c.l.b16 %v274
    %v324 = vunpack.c.h.b16 %v274
    %v325 = vunpack.c.l.b16 %v275
    %v326 = vunpack.c.h.b16 %v275
    %v327 = vunpack.c.l.b16 %v276
    %v328 = vunpack.c.h.b16 %v276
    %v329 = vunpack.c.l.b16 %v277
    %v330 = vunpack.c.h.b16 %v277
    %v331 = vunpack.c.l.b16 %v278
    %v332 = vunpack.c.h.b16 %v278
    %v333 = vunpack.c.l.b16 %v279
    %v334 = vunpack.c.h.b16 %v279
    %v335 = vunpack.c.l.b16 %v280
    %v336 = vunpack.c.h.b16 %v280
    %v337 = vunpack.c.l.b16 %v281
    %v338 = vunpack.c.h.b16 %v281
    %v339 = vunpack.c.l.b16 %v282
    %v340 = vunpack.c.h.b16 %v282
    %v341 = vunpack.c.l.b16 %v283
    %v342 = vunpack.c.h.b16 %v283
    %v343 = vunpack.c.l.b16 %v284
    %v344 = vunpack.c.h.b16 %v284
    %v345 = vpack.c.b16 %v315, %v313
    %v346 = vpack.c.b16 %v316, %v314
    %v347 = vpack.c.b16 %v319, %v317
    %v348 = vpack.c.b16 %v320, %v318
    %v349 = vpack.c.b16 %v323, %v321
    %v350 = vpack.c.b16 %v324, %v322
    %v351 = vpack.c.b16 %v327, %v325
    %v352 = vpack.c.b16 %v328, %v326
    %v353 = vpack.c.b16 %v331, %v329
    %v354 = vpack.c.b16 %v332, %v330
    %v355 = vpack.c.b16 %v335, %v333
    %v356 = vpack.c.b16 %v336, %v334
    %v357 = vpack.c.b16 %v339, %v337
    %v358 = vpack.c.b16 %v340, %v338
    %v359 = vpack.c.b16 %v343, %v341
    %v360 = vpack.c.b16 %v344, %v342
    %377 = vmatprep.subr.bf16.mxu0 %v346
    %378 = vmatpush1.bf16.msra.mxu0 %v345
    %379 = vmatprep.subr.bf16.mxu0 %v348
    %380 = vmatpush1.bf16.msra.mxu0 %v347
    %381 = vmatprep.subr.bf16.mxu0 %v350
    %382 = vmatpush1.bf16.msra.mxu0 %v349
    %383 = vmatprep.subr.bf16.mxu0 %v352
    %384 = vmatpush1.bf16.msra.mxu0 %v351
    %385 = vmatprep.subr.bf16.mxu0 %v354
    %386 = vmatpush1.bf16.msra.mxu0 %v353
    %387 = vmatprep.subr.bf16.mxu0 %v356
    %388 = vmatpush1.bf16.msra.mxu0 %v355
    %389 = vmatprep.subr.bf16.mxu0 %v358
    %390 = vmatpush1.bf16.msra.mxu0 %v357
    %391 = vmatprep.subr.bf16.mxu0 %v360
    %392 = vmatpush1.bf16.msra.mxu0 %v359
    %393 = vmatprep.subr.bf16.mxu0 0
    %394 = vmatpush1.bf16.msra.mxu0 0
    %395 = vmatprep.subr.bf16.mxu0 0
    %396 = vmatpush1.bf16.msra.mxu0 0
    %397 = vmatprep.subr.bf16.mxu0 0
    %398 = vmatpush1.bf16.msra.mxu0 0
    %399 = vmatprep.subr.bf16.mxu0 0
    %400 = vmatpush1.bf16.msra.mxu0 0
    %401 = vmatprep.subr.bf16.mxu0 0
    %402 = vmatpush1.bf16.msra.mxu0 0
    %403 = vmatprep.subr.bf16.mxu0 0
    %404 = vmatpush1.bf16.msra.mxu0 0
    %405 = vmatprep.subr.bf16.mxu0 0
    %406 = vmatpush1.bf16.msra.mxu0 0
    %407 = vmatprep.subr.bf16.mxu0 0
    %408 = vmatpush1.bf16.msra.mxu0 0
    %409 = vmatprep.mubr.bf16.mxu0 0
    %410 = vmatmul.mubr.bf16.gmra.mrb[0].mxu0 %v268
    %v411 = vpop.f32.mrb[0].mxu0
    %v412 = vadd.f32 %v290, %v411
    %v413 = vpop.f32.mrb[0].mxu0
    %v414 = vadd.f32 %v294, %v413
    %v415 = vpop.f32.mrb[0].mxu0
    %v416 = vpop.f32.mrb[0].mxu0
    %417 = vdwg.mxu0
    %v418 = vxor.u32 %v412, 2147483648
    %v419 = vxor.u32 %v414, 2147483648
    %v420 = vmul.f32 %v418, 1.442695
    %v421 = vpow.pop %v420
    %v422 = vmul.f32 %v419, 1.442695
    %v423 = vpow.pop %v422
    %v424 = vadd.f32 %v421, 1.0
    %v425 = vadd.f32 %v423, 1.0
    %v426 = vrcp.pop %v424
    %v427 = vmul.f32 1.0, %v426
    %v428 = vrcp.pop %v425
    %v429 = vmul.f32 1.0, %v428
    %430 = vst [vmem:[#allocation11] sm:$0xff] %v427
    %431 = vst [vmem:[#allocation11 + $0x8] sm:$0xff] %v429
    // Predicated region
    $region42: #{tpu_custom_call.1} parent=1 // pred_check
      _
    $region43: #{tpu_custom_call.1} parent=1 // pred_check_branch
      %433 = sbr.rel (0) target = $region45
    $region44: #{tpu_custom_call.1} parent=1 // pred_region
      %s435 = ssub.s32 256, 256
      %436 = vsyncadd [#allocation4], %s435
      %s438 = sshll.u32 [#allocation11], 4
      %s439 = int_to_ptr.vmem [resolvable:$true] %s438
      %441 = dma.vmem_to_hbm [thread:$0]  %s439, 256, %s5, [#allocation4]
    $region45: #{tpu_custom_call.1} parent=1 // pred_fallthru
      _
    // Predicated region
    $region46: #{tpu_custom_call.1} parent=1 // pred_check
      _
    $region47: #{tpu_custom_call.1} parent=1 // pred_check_branch
      %443 = sbr.rel (0) target = $region49
    $region48: #{tpu_custom_call.1} parent=1 // pred_region
      %444 = dma.done [#allocation4], 256
    $region49: #{tpu_custom_call.1} parent=1 // pred_fallthru
      _
    %445 = vsyncpa [#allocation3], 1
    %446 = vsyncpa [#allocation6], 1
    %447 = vsyncpa [#allocation9], 1
    %448 = vsyncpa [#allocation4], 1

</llo_original>
